<compile_context>
chip_gen: v6e
topology: v6e:2x2x1
jax: 0.10.0
libtpu: 0.0.40
codegen_flags: <defaults>
</compile_context>

<pallas_src>
import math

import jax
import jax.numpy as jnp
import numpy as np
from jax.experimental import pallas as pl
from jax.experimental.pallas import tpu as pltpu


def _posenc_kernel(x_ref, p_ref, tbl_ref, o_ref):
    """One tile of packed rows.

    x_ref:   (bt, K)  f32   K = RP * in_features packed input columns
    p_ref:   (K,  W)  f32   0/1 gather matrix (input col -> output col), W = RP * out_features
    tbl_ref: (3,  W)  f32   row 0: per-column multiplier (freq, or 1.0 for the raw-x column)
                            row 1: 1.0 where the column is the raw-x column
                            row 2: 1.0 where the column is a cos column
    o_ref:   (bt, W)
    """
    x = x_ref[...]
    p = p_ref[...]

    # Exact lane-dense gather of x into output-column order via the MXU.
    # Split x into three bf16-exact pieces so the 0/1 matmul is exact even if
    # the backend lowers f32 matmuls through bf16 passes.
    x1 = x.astype(jnp.bfloat16).astype(jnp.float32)
    r1 = x - x1
    x2 = r1.astype(jnp.bfloat16).astype(jnp.float32)
    x3 = r1 - x2
    g = jnp.dot(x1, p, preferred_element_type=jnp.float32)
    g = g + jnp.dot(x2, p, preferred_element_type=jnp.float32)
    g = g + jnp.dot(x3, p, preferred_element_type=jnp.float32)   # == gathered x

    mult = tbl_ref[0:1, :]      # (1, W) broadcast along sublanes
    is_x = tbl_ref[1:2, :]
    is_cos = tbl_ref[2:3, :]

    arg = g * mult              # f32 VPU multiply, identical rounding to the reference
    s = jnp.sin(arg)
    c = jnp.cos(arg)
    enc = jnp.where(is_cos > 0.5, c, s)
    o_ref[...] = jnp.where(is_x > 0.5, g, enc).astype(o_ref.dtype)


def _build_tables(in_features: int, num_frequencies: int, rp: int):
    """Compile-time constants: gather matrix P and per-column tables."""
    F, NF = in_features, num_frequencies
    group = 1 + 2 * NF
    out_dim = F * group

    # Same buffer values as the PyTorch module: (2**k) * pi in float32.
    freqs = (np.float32(2.0) ** np.arange(NF, dtype=np.float32)) * np.float32(np.pi)

    j = np.arange(out_dim)
    f_idx = j // group          # source feature of output column j
    k_idx = j % group           # 0 = raw x, 1..NF = sin, NF+1..2NF = cos

    if NF > 0:
        mult_row = np.where(k_idx == 0, np.float32(1.0), freqs[(k_idx - 1) % NF])
    else:
        mult_row = np.ones(out_dim, np.float32)
    is_x_row = (k_idx == 0).astype(np.float32)
    is_cos_row = (k_idx > NF).astype(np.float32)

    K = rp * F
    W = rp * out_dim
    tbl = np.stack(
        [np.tile(mult_row.astype(np.float32), rp),
         np.tile(is_x_row, rp),
         np.tile(is_cos_row, rp)],
        axis=0,
    ).astype(np.float32)                                   # (3, W)

    # P[i, J] = 1 iff packed input column i feeds packed output column J.
    src = np.repeat(np.arange(rp) * F, out_dim) + np.tile(f_idx, rp)
    P = np.zeros((K, W), dtype=np.float32)
    P[src, np.arange(W)] = 1.0
    return P, tbl


def pos_encoding(x: jax.Array, num_frequencies: int, *,
                 out_dtype=None, block_rows: int | None = None) -> jax.Array:
    """NeRF positional encoding. x: (B, in_features) float32 -> (B, in_features*(1+2*NF))."""
    B, F = x.shape
    NF = num_frequencies
    group = 1 + 2 * NF
    out_dim = F * group
    out_dtype = x.dtype if out_dtype is None else out_dtype

    # Row-packing factor RP: pack RP consecutive batch rows into one kernel row
    # so the store width RP*out_dim approaches a multiple of 128 lanes.
    # RP must divide B (keeps the wrapper reshapes free -- no pad/slice copies)
    # and is capped at 32 to bound the gather-matmul K and the size of P.
    rp_full = 128 // math.gcd(out_dim, 128)
    rp = math.gcd(math.gcd(B, rp_full), 32)

    packed_rows = B // rp
    K = rp * F
    W = rp * out_dim

    P, tbl = _build_tables(F, NF, rp)

    # Packed-row tile: ~4 MiB of output per pipeline buffer.  With double
    # buffering (in + out) plus the once-loaded constants this stays ~10 MiB,
    # inside the scoped-VMEM defaults of v5e/v6e/v7x.
    if block_rows is None:
        bt = max(8, (4 * 1024 * 1024) // (W * 4))
    else:
        bt = max(1, block_rows)
    if bt >= packed_rows:
        bt = packed_rows                      # single block: full extent is always legal
    else:
        bt = max(8, (bt // 8) * 8)            # tiled: keep the sublane dim 8-aligned

    grid = (pl.cdiv(packed_rows, bt),)
    x_packed = x.reshape(packed_rows, K)      # free: same contiguous row-major layout

    out_packed = pl.pallas_call(
        _posenc_kernel,
        out_shape=jax.ShapeDtypeStruct((packed_rows, W), out_dtype),
        grid=grid,
        in_specs=[
            pl.BlockSpec((bt, K), lambda i: (i, 0)),    # streamed input rows
            pl.BlockSpec((K, W), lambda i: (0, 0)),     # constant gather matrix (loaded once)
            pl.BlockSpec((3, W), lambda i: (0, 0)),     # constant per-column tables
        ],
        out_specs=pl.BlockSpec((bt, W), lambda i: (i, 0)),
        compiler_params=pltpu.CompilerParams(
            # v7x: shard the (embarrassingly parallel) row grid across both TCs.
            dimension_semantics=("parallel",),
        ),
    )(x_packed, jnp.asarray(P), jnp.asarray(tbl))

    return out_packed.reshape(B, out_dim)     # free reshape back to (B, out_features)


def pos_encoding_ref(x: jax.Array, num_frequencies: int) -> jax.Array:
    """Pure-JAX reference mirroring the PyTorch module."""
    f = jnp.arange(num_frequencies, dtype=jnp.float32)
    freqs = (2.0 ** f * jnp.pi)[None, :]
    xe = x[:, :, None]
    pos = jnp.concatenate([xe, jnp.sin(xe * freqs), jnp.cos(xe * freqs)], axis=-1)
    return pos.reshape(x.shape[0], -1)


if __name__ == "__main__":
    key = jax.random.PRNGKey(0)
    k_small, k_large = jax.random.split(key)

    # 1) Small shape consistent with the module: batch=2, in_features=4, NF=6.
    batch, in_features, num_frequencies = 2, 4, 6
    x = jax.random.uniform(k_small, (batch, in_features), dtype=jnp.float32)
    out = jax.block_until_ready(pos_encoding(x, num_frequencies))
    ref = pos_encoding_ref(x, num_frequencies)
    assert out.shape == (batch, in_features * (1 + 2 * num_frequencies)), out.shape
    assert jnp.allclose(out, ref, atol=1e-5, rtol=1e-5), "small-shape mismatch vs reference"

    # 2) Larger batch: exercises row packing (RP=32 -> 1664-lane blocks), a
    #    multi-step pipelined grid (block_rows=24 -> partial last block) and
    #    the once-loaded constant operands.  Slightly looser atol: at
    #    |arg| ~ 32*pi the f32 ulp is ~8e-6, so 1e-5 is at the noise floor.
    xb = jax.random.uniform(k_large, (4096, in_features), dtype=jnp.float32)
    outb = jax.block_until_ready(pos_encoding(xb, num_frequencies, block_rows=24))
    refb = pos_encoding_ref(xb, num_frequencies)
    assert outb.shape == refb.shape, outb.shape
    assert jnp.allclose(outb, refb, atol=2e-5, rtol=1e-5), "large-shape mismatch vs reference"

    print("KERNEL_OK")
</pallas_src>

<mosaic_0001>
module attributes {stable_mosaic.version = 11 : i64} {
  func.func @_posenc_kernel(%arg0: i32, %arg1: memref<1x8xf32, #tpu.memory_space<vmem>>, %arg2: memref<8x104xf32, #tpu.memory_space<vmem>>, %arg3: memref<3x104xf32, #tpu.memory_space<vmem>>, %arg4: memref<1x104xf32, #tpu.memory_space<vmem>>) attributes {dimension_semantics = [#tpu.dimension_semantics<parallel>], iteration_bounds = array<i64: 1>, scalar_prefetch = 0 : i64, scratch_operands = 0 : i64, tpu.core_type = #tpu.core_type<tc>, window_params = [{transform_indices = @transform_0, window_bounds = array<i64: 1, 8>}, {pipeline_mode = #tpu.pipeline_mode<synchronous>, transform_indices = @transform_1, window_bounds = array<i64: 8, 104>}, {pipeline_mode = #tpu.pipeline_mode<synchronous>, transform_indices = @transform_2, window_bounds = array<i64: 3, 104>}, {transform_indices = @transform_3, window_bounds = array<i64: 1, 104>}]} {
    %c0 = arith.constant 0 : index
    %c0_0 = arith.constant 0 : index
    %0 = vector.load %arg1[%c0, %c0_0] : memref<1x8xf32, #tpu.memory_space<vmem>>, vector<1x8xf32>
    %c0_1 = arith.constant 0 : index
    %c0_2 = arith.constant 0 : index
    %1 = vector.load %arg2[%c0_1, %c0_2] : memref<8x104xf32, #tpu.memory_space<vmem>>, vector<8x104xf32>
    %2 = arith.truncf %0 : vector<1x8xf32> to vector<1x8xbf16>
    %3 = arith.extf %2 : vector<1x8xbf16> to vector<1x8xf32>
    %4 = arith.subf %0, %3 : vector<1x8xf32>
    %5 = arith.truncf %4 : vector<1x8xf32> to vector<1x8xbf16>
    %6 = arith.extf %5 : vector<1x8xbf16> to vector<1x8xf32>
    %7 = arith.subf %4, %6 : vector<1x8xf32>
    %cst = arith.constant dense<0.000000e+00> : vector<1x104xf32>
    %8 = tpu.matmul %3, %1, %cst {dimension_numbers = #tpu.dot_dimension_numbers<[1], [0], [0], [1], [0, 0, 1, 1], [], []>} : vector<1x8xf32>, vector<8x104xf32>, vector<1x104xf32> -> vector<1x104xf32>
    %cst_3 = arith.constant dense<0.000000e+00> : vector<1x104xf32>
    %9 = tpu.matmul %6, %1, %cst_3 {dimension_numbers = #tpu.dot_dimension_numbers<[1], [0], [0], [1], [0, 0, 1, 1], [], []>} : vector<1x8xf32>, vector<8x104xf32>, vector<1x104xf32> -> vector<1x104xf32>
    %10 = arith.addf %8, %9 : vector<1x104xf32>
    %cst_4 = arith.constant dense<0.000000e+00> : vector<1x104xf32>
    %11 = tpu.matmul %7, %1, %cst_4 {dimension_numbers = #tpu.dot_dimension_numbers<[1], [0], [0], [1], [0, 0, 1, 1], [], []>} : vector<1x8xf32>, vector<8x104xf32>, vector<1x104xf32> -> vector<1x104xf32>
    %12 = arith.addf %10, %11 : vector<1x104xf32>
    %c0_5 = arith.constant 0 : index
    %c0_6 = arith.constant 0 : index
    %13 = vector.load %arg3[%c0_5, %c0_6] : memref<3x104xf32, #tpu.memory_space<vmem>>, vector<1x104xf32>
    %c1 = arith.constant 1 : index
    %c0_7 = arith.constant 0 : index
    %14 = vector.load %arg3[%c1, %c0_7] : memref<3x104xf32, #tpu.memory_space<vmem>>, vector<1x104xf32>
    %c2 = arith.constant 2 : index
    %c0_8 = arith.constant 0 : index
    %15 = vector.load %arg3[%c2, %c0_8] : memref<3x104xf32, #tpu.memory_space<vmem>>, vector<1x104xf32>
    %16 = arith.mulf %12, %13 : vector<1x104xf32>
    %17 = math.sin %16 : vector<1x104xf32>
    %18 = math.cos %16 : vector<1x104xf32>
    %cst_9 = arith.constant 5.000000e-01 : f32
    %19 = vector.broadcast %cst_9 : f32 to vector<1x104xf32>
    %20 = arith.cmpf ogt, %15, %19 : vector<1x104xf32>
    %21 = arith.select %20, %18, %17 : vector<1x104xi1>, vector<1x104xf32>
    %cst_10 = arith.constant 5.000000e-01 : f32
    %22 = vector.broadcast %cst_10 : f32 to vector<1x104xf32>
    %23 = arith.cmpf ogt, %14, %22 : vector<1x104xf32>
    %24 = arith.select %23, %12, %21 : vector<1x104xi1>, vector<1x104xf32>
    %c0_11 = arith.constant 0 : index
    %c0_12 = arith.constant 0 : index
    %25 = vector.load %arg4[%c0_11, %c0_12] : memref<1x104xf32, #tpu.memory_space<vmem>>, vector<1x104xf32>
    tpu.vector_store %arg4[%c0_11, %c0_12], %24 {strides = array<i32>} : memref<1x104xf32, #tpu.memory_space<vmem>>, vector<1x104xf32>,
    return
  }
  func.func @transform_0(%arg0: i32) -> (i32, i32) {
    %c0_i32 = arith.constant 0 : i32
    %c0_i32_0 = arith.constant 0 : i32
    return %arg0, %c0_i32 : i32, i32
  }
  func.func @transform_1(%arg0: i32) -> (i32, i32) {
    %c0_i32 = arith.constant 0 : i32
    %c0_i32_0 = arith.constant 0 : i32
    %c0_i32_1 = arith.constant 0 : i32
    return %c0_i32, %c0_i32_0 : i32, i32
  }
  func.func @transform_2(%arg0: i32) -> (i32, i32) {
    %c0_i32 = arith.constant 0 : i32
    %c0_i32_0 = arith.constant 0 : i32
    %c0_i32_1 = arith.constant 0 : i32
    return %c0_i32, %c0_i32_0 : i32, i32
  }
  func.func @transform_3(%arg0: i32) -> (i32, i32) {
    %c0_i32 = arith.constant 0 : i32
    %c0_i32_0 = arith.constant 0 : i32
    return %arg0, %c0_i32 : i32, i32
  }
}

</mosaic_0001>

<llo_original>
// kernel: tpu_custom_call.1
$region0: #{tpu_custom_call.1}
  #allocation0 [shape = 'u32[]', space=smem, size = 0x4, offset = 0x4, fixed_abs, tag = 'smem constant byte address 0x4 - core index']
  #allocation1 [shape = 'u32[144,128]{1,0:T(1,128)}', space=vmem, size = 0x12000, scoped, tag = 'internal scratch']
  %s0 = inlined_call_operand.hbm [shape: f32[1,8], index: 0, kind: input, shape index: {}]
  %s1 = inlined_call_operand.hbm [shape: f32[8,104], index: 1, kind: input, shape index: {}]
  %s2 = inlined_call_operand.hbm [shape: f32[3,104], index: 2, kind: input, shape index: {}]
  %s3 = inlined_call_operand.hbm [shape: f32[1,104], index: 3, kind: output, shape index: {}]
  %s4 = sld [smem:[#allocation0]]
  $region34: #{tpu_custom_call.1} parent=0
    _
  %s6 = ssub.s32 1, %s4
  %s7 = scalar_select 0, %s6, %s4
  $region1: #{tpu_custom_call.1} parent=0
    #allocation2 [shape = 'u8[512]{0}', space=vmem, size = 0x400, scoped, tag = 'input window, operand 0, single buffered']
    #allocation3 [shape = 's32[1]{0}', space=sflag, size = 0x4, scoped, tag = 'scoped memory for tpu_custom_call.1']
    #allocation4 [shape = 's32[1]{0}', space=sflag, size = 0x4, scoped, tag = 'scoped memory for tpu_custom_call.1']
    #allocation5 [shape = 'u8[4096]{0}', space=vmem, size = 0x1000, scoped, tag = 'input window, operand 1, single buffered']
    #allocation6 [shape = 's32[1]{0}', space=sflag, size = 0x4, scoped, tag = 'scoped memory for tpu_custom_call.1']
    #allocation7 [shape = 'u8[2048]{0}', space=vmem, size = 0x800, scoped, tag = 'input window, operand 2, single buffered']
    #allocation8 [shape = 'u8[512]{0}', space=vmem, size = 0x400, scoped, tag = 'output window, operand 0, single buffered']
    %8 = vsyncpa [#allocation3], 0
    %9 = vsyncpa [#allocation6], 0
    %10 = vsyncpa [#allocation4], 0
    // Predicated region
    $region2: #{tpu_custom_call.1} parent=1 // pred_check
      _
    $region3: #{tpu_custom_call.1} parent=1 // pred_check_branch
      %12 = sbr.rel (0) target = $region5
    $region4: #{tpu_custom_call.1} parent=1 // pred_region
      %s14 = ssub.s32 16, 16
      %15 = vsyncadd [#allocation3], %s14
      %s17 = sshll.u32 [#allocation2], 4
      %s18 = int_to_ptr.vmem [resolvable:$true] %s17
      %20 = dma.hbm_to_vmem [thread:$0]  %s0, 16, %s18, [#allocation3]
    $region5: #{tpu_custom_call.1} parent=1 // pred_fallthru
      _
    // Predicated region
    $region6: #{tpu_custom_call.1} parent=1 // pred_check
      _
    $region7: #{tpu_custom_call.1} parent=1 // pred_check_branch
      %22 = sbr.rel (0) target = $region9
    $region8: #{tpu_custom_call.1} parent=1 // pred_region
      %s24 = ssub.s32 128, 128
      %25 = vsyncadd [#allocation6], %s24
      %s27 = sshll.u32 [#allocation5], 4
      %s28 = int_to_ptr.vmem [resolvable:$true] %s27
      %30 = dma.hbm_to_vmem [thread:$0]  %s1, 128, %s28, [#allocation6]
    $region9: #{tpu_custom_call.1} parent=1 // pred_fallthru
      _
    // Predicated region
    $region10: #{tpu_custom_call.1} parent=1 // pred_check
      _
    $region11: #{tpu_custom_call.1} parent=1 // pred_check_branch
      %32 = sbr.rel (0) target = $region13
    $region12: #{tpu_custom_call.1} parent=1 // pred_region
      %s34 = ssub.s32 64, 64
      %35 = vsyncadd [#allocation6], %s34
      %s37 = sshll.u32 [#allocation7], 4
      %s38 = int_to_ptr.vmem [resolvable:$true] %s37
      %40 = dma.hbm_to_vmem [thread:$0]  %s2, 64, %s38, [#allocation6]
    $region13: #{tpu_custom_call.1} parent=1 // pred_fallthru
      _
    // Predicated region
    $region14: #{tpu_custom_call.1} parent=1 // pred_check
      _
    $region15: #{tpu_custom_call.1} parent=1 // pred_check_branch
      %42 = sbr.rel (0) target = $region17
    $region16: #{tpu_custom_call.1} parent=1 // pred_region
      %43 = dma.done [#allocation3], 16
    $region17: #{tpu_custom_call.1} parent=1 // pred_fallthru
      _
    // Predicated region
    $region18: #{tpu_custom_call.1} parent=1 // pred_check
      _
    $region19: #{tpu_custom_call.1} parent=1 // pred_check_branch
      %45 = sbr.rel (0) target = $region21
    $region20: #{tpu_custom_call.1} parent=1 // pred_region
      %46 = dma.done [#allocation6], 128
    $region21: #{tpu_custom_call.1} parent=1 // pred_fallthru
      _
    // Predicated region
    $region22: #{tpu_custom_call.1} parent=1 // pred_check
      _
    $region23: #{tpu_custom_call.1} parent=1 // pred_check_branch
      %48 = sbr.rel (0) target = $region25
    $region24: #{tpu_custom_call.1} parent=1 // pred_region
      %49 = dma.done [#allocation6], 64
    $region25: #{tpu_custom_call.1} parent=1 // pred_fallthru
      _
    %v50 = vld [vmem:[#allocation2] sm:$0x1]
    %v51 = vld [vmem:[#allocation5] sm:$0xff]
    %v52 = vpack.c.bf16 %v50, %v50
    %v53 = vunpack.c.l.bf16 %v52
    %v54 = vsub.f32 %v50, %v53
    %v55 = vpack.c.bf16 %v54, %v54
    %v56 = vunpack.c.l.bf16 %v55
    %v57 = vsub.f32 %v54, %v56
    %vm58 = vcmask 64512
    %v60 = vsel %vm58, %v56, 0
    %62 = vmatprep.subr.mxu0 0.0
    %63 = vmatpush1.msra.mxu0 0.0
    %64 = vmatprep.subr.mxu0 0.0
    %65 = vmatpush1.msra.mxu0 0.0
    %66 = vmatprep.subr.mxu0 0.0
    %67 = vmatpush1.msra.mxu0 0.0
    %68 = vmatprep.subr.mxu0 0.0
    %69 = vmatpush1.msra.mxu0 0.0
    %70 = vmatprep.subr.mxu0 0.0
    %71 = vmatpush1.msra.mxu0 0.0
    %72 = vmatprep.subr.mxu0 0.0
    %73 = vmatpush1.msra.mxu0 0.0
    %74 = vmatprep.subr.mxu0 0.0
    %75 = vmatpush1.msra.mxu0 0.0
    %76 = vmatprep.subr.mxu0 0.0
    %77 = vmatpush1.msra.mxu0 0.0
    %78 = vmatprep.subr.mxu0 0.0
    %79 = vmatpush1.msra.mxu0 0.0
    %80 = vmatprep.subr.mxu0 0.0
    %81 = vmatpush1.msra.mxu0 0.0
    %82 = vmatprep.subr.mxu0 0.0
    %83 = vmatpush1.msra.mxu0 0.0
    %84 = vmatprep.subr.mxu0 0.0
    %85 = vmatpush1.msra.mxu0 0.0
    %86 = vmatprep.subr.mxu0 0.0
    %87 = vmatpush1.msra.mxu0 0.0
    %88 = vmatprep.subr.mxu0 0.0
    %89 = vmatpush1.msra.mxu0 0.0
    %90 = vmatprep.subr.mxu0 0.0
    %91 = vmatpush1.msra.mxu0 0.0
    %92 = vmatprep.subr.mxu0 0.0
    %93 = vmatpush1.msra.mxu0 %v51
    %94 = vmatprep.subr.mxu0 0.0
    %95 = vmatpush2.msra.mxu0 0.0
    %96 = vmatprep.subr.mxu0 0.0
    %97 = vmatpush2.msra.mxu0 0.0
    %98 = vmatprep.subr.mxu0 0.0
    %99 = vmatpush2.msra.mxu0 0.0
    %100 = vmatprep.subr.mxu0 0.0
    %101 = vmatpush2.msra.mxu0 0.0
    %102 = vmatprep.subr.mxu0 0.0
    %103 = vmatpush2.msra.mxu0 0.0
    %104 = vmatprep.subr.mxu0 0.0
    %105 = vmatpush2.msra.mxu0 0.0
    %106 = vmatprep.subr.mxu0 0.0
    %107 = vmatpush2.msra.mxu0 0.0
    %108 = vmatprep.subr.mxu0 0.0
    %109 = vmatpush2.msra.mxu0 0.0
    %110 = vmatprep.subr.mxu0 0.0
    %111 = vmatpush2.msra.mxu0 0.0
    %112 = vmatprep.subr.mxu0 0.0
    %113 = vmatpush2.msra.mxu0 0.0
    %114 = vmatprep.subr.mxu0 0.0
    %115 = vmatpush2.msra.mxu0 0.0
    %116 = vmatprep.subr.mxu0 0.0
    %117 = vmatpush2.msra.mxu0 0.0
    %118 = vmatprep.subr.mxu0 0.0
    %119 = vmatpush2.msra.mxu0 0.0
    %120 = vmatprep.subr.mxu0 0.0
    %121 = vmatpush2.msra.mxu0 0.0
    %122 = vmatprep.subr.mxu0 0.0
    %123 = vmatpush2.msra.mxu0 0.0
    %124 = vmatprep.subr.mxu0 0.0
    %125 = vmatpush2.msra.mxu0 0.0
    %126 = vmatprep.mubr.f32.mxu0 0.0
    %127 = vmatmul.mubr.f32.gmra.mxu0 %v60
    %v128 = vpop.f32.mrf.mxu0
    %v129 = vadd.f32 0.0, %v128
    %v130 = vpop.f32.mrf.mxu0
    %131 = vdwg.mxu0
    %v133 = vsel %vm58, %v53, 0
    %135 = vmatprep.subr.mxu0 0.0
    %136 = vmatpush1.msra.mxu0 0.0
    %137 = vmatprep.subr.mxu0 0.0
    %138 = vmatpush1.msra.mxu0 0.0
    %139 = vmatprep.subr.mxu0 0.0
    %140 = vmatpush1.msra.mxu0 0.0
    %141 = vmatprep.subr.mxu0 0.0
    %142 = vmatpush1.msra.mxu0 0.0
    %143 = vmatprep.subr.mxu0 0.0
    %144 = vmatpush1.msra.mxu0 0.0
    %145 = vmatprep.subr.mxu0 0.0
    %146 = vmatpush1.msra.mxu0 0.0
    %147 = vmatprep.subr.mxu0 0.0
    %148 = vmatpush1.msra.mxu0 0.0
    %149 = vmatprep.subr.mxu0 0.0
    %150 = vmatpush1.msra.mxu0 0.0
    %151 = vmatprep.subr.mxu0 0.0
    %152 = vmatpush1.msra.mxu0 0.0
    %153 = vmatprep.subr.mxu0 0.0
    %154 = vmatpush1.msra.mxu0 0.0
    %155 = vmatprep.subr.mxu0 0.0
    %156 = vmatpush1.msra.mxu0 0.0
    %157 = vmatprep.subr.mxu0 0.0
    %158 = vmatpush1.msra.mxu0 0.0
    %159 = vmatprep.subr.mxu0 0.0
    %160 = vmatpush1.msra.mxu0 0.0
    %161 = vmatprep.subr.mxu0 0.0
    %162 = vmatpush1.msra.mxu0 0.0
    %163 = vmatprep.subr.mxu0 0.0
    %164 = vmatpush1.msra.mxu0 0.0
    %165 = vmatprep.subr.mxu0 0.0
    %166 = vmatpush1.msra.mxu0 %v51
    %167 = vmatprep.subr.mxu0 0.0
    %168 = vmatpush2.msra.mxu0 0.0
    %169 = vmatprep.subr.mxu0 0.0
    %170 = vmatpush2.msra.mxu0 0.0
    %171 = vmatprep.subr.mxu0 0.0
    %172 = vmatpush2.msra.mxu0 0.0
    %173 = vmatprep.subr.mxu0 0.0
    %174 = vmatpush2.msra.mxu0 0.0
    %175 = vmatprep.subr.mxu0 0.0
    %176 = vmatpush2.msra.mxu0 0.0
    %177 = vmatprep.subr.mxu0 0.0
    %178 = vmatpush2.msra.mxu0 0.0
    %179 = vmatprep.subr.mxu0 0.0
    %180 = vmatpush2.msra.mxu0 0.0
    %181 = vmatprep.subr.mxu0 0.0
    %182 = vmatpush2.msra.mxu0 0.0
    %183 = vmatprep.subr.mxu0 0.0
    %184 = vmatpush2.msra.mxu0 0.0
    %185 = vmatprep.subr.mxu0 0.0
    %186 = vmatpush2.msra.mxu0 0.0
    %187 = vmatprep.subr.mxu0 0.0
    %188 = vmatpush2.msra.mxu0 0.0
    %189 = vmatprep.subr.mxu0 0.0
    %190 = vmatpush2.msra.mxu0 0.0
    %191 = vmatprep.subr.mxu0 0.0
    %192 = vmatpush2.msra.mxu0 0.0
    %193 = vmatprep.subr.mxu0 0.0
    %194 = vmatpush2.msra.mxu0 0.0
    %195 = vmatprep.subr.mxu0 0.0
    %196 = vmatpush2.msra.mxu0 0.0
    %197 = vmatprep.subr.mxu0 0.0
    %198 = vmatpush2.msra.mxu0 0.0
    %199 = vmatprep.mubr.f32.mxu0 0.0
    %200 = vmatmul.mubr.f32.gmra.mxu0 %v133
    %v201 = vpop.f32.mrf.mxu0
    %v202 = vadd.f32 %v129, %v201
    %v203 = vpop.f32.mrf.mxu0
    %204 = vdwg.mxu0
    %v206 = vsel %vm58, %v57, 0
    %208 = vmatprep.subr.mxu0 0.0
    %209 = vmatpush1.msra.mxu0 0.0
    %210 = vmatprep.subr.mxu0 0.0
    %211 = vmatpush1.msra.mxu0 0.0
    %212 = vmatprep.subr.mxu0 0.0
    %213 = vmatpush1.msra.mxu0 0.0
    %214 = vmatprep.subr.mxu0 0.0
    %215 = vmatpush1.msra.mxu0 0.0
    %216 = vmatprep.subr.mxu0 0.0
    %217 = vmatpush1.msra.mxu0 0.0
    %218 = vmatprep.subr.mxu0 0.0
    %219 = vmatpush1.msra.mxu0 0.0
    %220 = vmatprep.subr.mxu0 0.0
    %221 = vmatpush1.msra.mxu0 0.0
    %222 = vmatprep.subr.mxu0 0.0
    %223 = vmatpush1.msra.mxu0 0.0
    %224 = vmatprep.subr.mxu0 0.0
    %225 = vmatpush1.msra.mxu0 0.0
    %226 = vmatprep.subr.mxu0 0.0
    %227 = vmatpush1.msra.mxu0 0.0
    %228 = vmatprep.subr.mxu0 0.0
    %229 = vmatpush1.msra.mxu0 0.0
    %230 = vmatprep.subr.mxu0 0.0
    %231 = vmatpush1.msra.mxu0 0.0
    %232 = vmatprep.subr.mxu0 0.0
    %233 = vmatpush1.msra.mxu0 0.0
    %234 = vmatprep.subr.mxu0 0.0
    %235 = vmatpush1.msra.mxu0 0.0
    %236 = vmatprep.subr.mxu0 0.0
    %237 = vmatpush1.msra.mxu0 0.0
    %238 = vmatprep.subr.mxu0 0.0
    %239 = vmatpush1.msra.mxu0 %v51
    %240 = vmatprep.subr.mxu0 0.0
    %241 = vmatpush2.msra.mxu0 0.0
    %242 = vmatprep.subr.mxu0 0.0
    %243 = vmatpush2.msra.mxu0 0.0
    %244 = vmatprep.subr.mxu0 0.0
    %245 = vmatpush2.msra.mxu0 0.0
    %246 = vmatprep.subr.mxu0 0.0
    %247 = vmatpush2.msra.mxu0 0.0
    %248 = vmatprep.subr.mxu0 0.0
    %249 = vmatpush2.msra.mxu0 0.0
    %250 = vmatprep.subr.mxu0 0.0
    %251 = vmatpush2.msra.mxu0 0.0
    %252 = vmatprep.subr.mxu0 0.0
    %253 = vmatpush2.msra.mxu0 0.0
    %254 = vmatprep.subr.mxu0 0.0
    %255 = vmatpush2.msra.mxu0 0.0
    %256 = vmatprep.subr.mxu0 0.0
    %257 = vmatpush2.msra.mxu0 0.0
    %258 = vmatprep.subr.mxu0 0.0
    %259 = vmatpush2.msra.mxu0 0.0
    %260 = vmatprep.subr.mxu0 0.0
    %261 = vmatpush2.msra.mxu0 0.0
    %262 = vmatprep.subr.mxu0 0.0
    %263 = vmatpush2.msra.mxu0 0.0
    %264 = vmatprep.subr.mxu0 0.0
    %265 = vmatpush2.msra.mxu0 0.0
    %266 = vmatprep.subr.mxu0 0.0
    %267 = vmatpush2.msra.mxu0 0.0
    %268 = vmatprep.subr.mxu0 0.0
    %269 = vmatpush2.msra.mxu0 0.0
    %270 = vmatprep.subr.mxu0 0.0
    %271 = vmatpush2.msra.mxu0 0.0
    %272 = vmatprep.mubr.f32.mxu0 0.0
    %273 = vmatmul.mubr.f32.gmra.mxu0 %v206
    %v274 = vpop.f32.mrf.mxu0
    %v275 = vadd.f32 0.0, %v274
    %v276 = vpop.f32.mrf.mxu0
    %277 = vdwg.mxu0
    %v278 = vadd.f32 %v202, %v275
    %v279 = vld [vmem:[#allocation7] sm:$0x1]
    %v280 = vld [vmem:[#allocation7 + $0x1] sm:$0x1]
    %v281 = vld [vmem:[#allocation7 + $0x2] sm:$0x1]
    %v282 = vmul.f32 %v278, %v279
    %v283 = vand.u32 2147483647, %v282
    %vm284 = vcmp.le.f32.partialorder %v283, 0.7853982
    %vm285 = vcmp.lt.s32.totalorder %v282, 0
    %v286 = vand.u32 %v282, 2139095040
    %v287 = vshrl.u32 %v286, 23
    %v288 = vsub.s32 %v287, 127
    %v289 = vand.u32 2147483647, %v282
    %v290 = vand.u32 %v289, 8388607
    %v291 = vor.u32 %v290, 8388608
    %v292 = vsub.s32 0, %v291
    %v293 = vadd.s32 %v288, 1
    %vm294 = vcmp.gt.s32.totalorder %v293, 0
    %v295 = vsel %vm294, %v293, 0
    %v296 = vshrl.u32 %v295, 5
    %v297 = vand.u32 %v295, 31
    %v298 = vsub.s32 32, %v297
    %v299 = vshrl.u32 683565275, %v298
    %v300 = vshll.u32 683565275, %v297
    %v301 = vshrl.u32 2475754826, %v298
    %v302 = vor.u32 %v300, %v301
    %v303 = vshll.u32 2475754826, %v297
    %v304 = vshrl.u32 2131351028, %v298
    %v305 = vor.u32 %v303, %v304
    %v306 = vshll.u32 2131351028, %v297
    %v307 = vshrl.u32 2102212464, %v298
    %v308 = vor.u32 %v306, %v307
    %v309 = vshll.u32 2102212464, %v297
    %v310 = vshrl.u32 920167782, %v298
    %v311 = vor.u32 %v309, %v310
    %v312 = vshll.u32 920167782, %v297
    %v313 = vshrl.u32 1326507024, %v298
    %v314 = vor.u32 %v312, %v313
    %vm315 = vcmp.lt.s32.totalorder %v296, 1
    %vm316 = vcmp.lt.s32.totalorder %v296, 2
    %vm317 = vcmp.lt.s32.totalorder %v296, 3
    %vm318 = vcmp.lt.s32.totalorder %v296, 4
    %v319 = vsel %vm315, %v299, %v302
    %v320 = vsel %vm318, %v308, 2102212464
    %v321 = vsel %vm317, %v305, %v320
    %v322 = vsel %vm316, %v319, %v321
    %v323 = vsel %vm315, %v302, %v305
    %v324 = vsel %vm318, %v311, 920167782
    %v325 = vsel %vm317, %v308, %v324
    %v326 = vsel %vm316, %v323, %v325
    %v327 = vsel %vm315, %v305, %v308
    %v328 = vsel %vm318, %v314, 1326507024
    %v329 = vsel %vm317, %v311, %v328
    %v330 = vsel %vm316, %v327, %v329
    %v331 = vshll.u32 %v291, 8
    %v332 = vmul.u32.u64.compose %v331, %v330
    %v333 = vextract.low.u32 %v332
    %v334 = vextract.high.u32 %v332
    %v335 = vmul.u32.u64.compose %v331, %v326
    %v336 = vextract.low.u32 %v335
    %v337 = vextract.high.u32 %v335
    %v338 = vmul.u32 %v331, %v322
    %v339 = vadd.s32 %v334, %v336
    %vm340 = vc.u32 %v334, %v336
    %v341 = vadd.s32 %v337, 1
    %v342 = vsel %vm340, %v341, %v337
    %v343 = vadd.s32 %v338, %v342
    %v344 = vadd.s32 %v343, 536870912
    %v345 = vshrl.u32 %v344, 30
    %v346 = vshll.u32 %v345, 30
    %v347 = vsub.s32 %v343, %v346
    %vm348 = vcmp.lt.s32.totalorder %v347, 0
    %v349 = vsub.s32 0, %v347
    %v350 = vsel %vm348, %v349, %v347
    %v351 = vclz %v350
    %v352 = vsub.s32 %v351, 2
    %vm353 = vcmp.gt.s32.totalorder 0, %v352
    %v354 = vsel %vm353, 0, %v352
    %v355 = vsub.s32 32, %v354
    %v356 = vshll.u32 %v347, %v354
    %v357 = vshrl.u32 %v339, %v355
    %v358 = vor.u32 %v356, %v357
    %v359 = vsub.s32 4294967266, %v354
    %v360 = vadd.s32 %v359, 127
    %v361 = vshll.u32 %v360, 23
    %v362 = vor.u32 4788187, %v361
    %v363 = vand.u32 2147483647, %v362
    %v365 = vcvt.s32.f32 %v358
    %v366 = vmul.f32 %v365, %v363
    %v367 = vxor.u32 %v366, 2147483648
    %v368 = vsel %vm285, %v367, %v366
    %v369 = vsub.s32 4, %v345
    %v370 = vsel %vm285, %v369, %v345
    %v371 = vsel %vm284, %v282, %v368
    %v372 = vsel %vm284, 0, %v370
    %v373 = vcosq.f32.pop %v371
    %v374 = vsinq.f32.pop %v371
    %vm375 = vweird.f32 %v282
    %v376 = vadd.s32 %v372, 3
    %v377 = vand.u32 %v376, 3
    %vm378 = vcmp.lt.s32.totalorder %v377, 2
    %vm379 = vcmp.eq.s32.totalorder %v377, 0
    %v380 = vxor.u32 %v374, 2147483648
    %v381 = vsel %vm379, %v373, %v380
    %vm382 = vcmp.eq.s32.totalorder %v377, 2
    %v383 = vxor.u32 %v373, 2147483648
    %v384 = vsel %vm382, %v383, %v374
    %v385 = vsel %vm378, %v381, %v384
    %v386 = vsel %vm375, nan, %v385
    %v387 = vand.u32 2147483647, %v282
    %vm388 = vcmp.le.f32.partialorder %v387, 0.7853982
    %vm389 = vcmp.lt.s32.totalorder %v282, 0
    %v390 = vand.u32 %v282, 2139095040
    %v391 = vshrl.u32 %v390, 23
    %v392 = vsub.s32 %v391, 127
    %v393 = vand.u32 2147483647, %v282
    %v394 = vand.u32 %v393, 8388607
    %v395 = vor.u32 %v394, 8388608
    %v396 = vsub.s32 0, %v395
    %v397 = vadd.s32 %v392, 1
    %vm398 = vcmp.gt.s32.totalorder %v397, 0
    %v399 = vsel %vm398, %v397, 0
    %v400 = vshrl.u32 %v399, 5
    %v401 = vand.u32 %v399, 31
    %v402 = vsub.s32 32, %v401
    %v403 = vshrl.u32 683565275, %v402
    %v404 = vshll.u32 683565275, %v401
    %v405 = vshrl.u32 2475754826, %v402
    %v406 = vor.u32 %v404, %v405
    %v407 = vshll.u32 2475754826, %v401
    %v408 = vshrl.u32 2131351028, %v402
    %v409 = vor.u32 %v407, %v408
    %v410 = vshll.u32 2131351028, %v401
    %v411 = vshrl.u32 2102212464, %v402
    %v412 = vor.u32 %v410, %v411
    %v413 = vshll.u32 2102212464, %v401
    %v414 = vshrl.u32 920167782, %v402
    %v415 = vor.u32 %v413, %v414
    %v416 = vshll.u32 920167782, %v401
    %v417 = vshrl.u32 1326507024, %v402
    %v418 = vor.u32 %v416, %v417
    %vm419 = vcmp.lt.s32.totalorder %v400, 1
    %vm420 = vcmp.lt.s32.totalorder %v400, 2
    %vm421 = vcmp.lt.s32.totalorder %v400, 3
    %vm422 = vcmp.lt.s32.totalorder %v400, 4
    %v423 = vsel %vm419, %v403, %v406
    %v424 = vsel %vm422, %v412, 2102212464
    %v425 = vsel %vm421, %v409, %v424
    %v426 = vsel %vm420, %v423, %v425
    %v427 = vsel %vm419, %v406, %v409
    %v428 = vsel %vm422, %v415, 920167782
    %v429 = vsel %vm421, %v412, %v428
    %v430 = vsel %vm420, %v427, %v429
    %v431 = vsel %vm419, %v409, %v412
    %v432 = vsel %vm422, %v418, 1326507024
    %v433 = vsel %vm421, %v415, %v432
    %v434 = vsel %vm420, %v431, %v433
    %v435 = vshll.u32 %v395, 8
    %v436 = vmul.u32.u64.compose %v435, %v434
    %v437 = vextract.low.u32 %v436
    %v438 = vextract.high.u32 %v436
    %v439 = vmul.u32.u64.compose %v435, %v430
    %v440 = vextract.low.u32 %v439
    %v441 = vextract.high.u32 %v439
    %v442 = vmul.u32 %v435, %v426
    %v443 = vadd.s32 %v438, %v440
    %vm444 = vc.u32 %v438, %v440
    %v445 = vadd.s32 %v441, 1
    %v446 = vsel %vm444, %v445, %v441
    %v447 = vadd.s32 %v442, %v446
    %v448 = vadd.s32 %v447, 536870912
    %v449 = vshrl.u32 %v448, 30
    %v450 = vshll.u32 %v449, 30
    %v451 = vsub.s32 %v447, %v450
    %vm452 = vcmp.lt.s32.totalorder %v451, 0
    %v453 = vsub.s32 0, %v451
    %v454 = vsel %vm452, %v453, %v451
    %v455 = vclz %v454
    %v456 = vsub.s32 %v455, 2
    %vm457 = vcmp.gt.s32.totalorder 0, %v456
    %v458 = vsel %vm457, 0, %v456
    %v459 = vsub.s32 32, %v458
    %v460 = vshll.u32 %v451, %v458
    %v461 = vshrl.u32 %v443, %v459
    %v462 = vor.u32 %v460, %v461
    %v463 = vsub.s32 4294967266, %v458
    %v464 = vadd.s32 %v463, 127
    %v465 = vshll.u32 %v464, 23
    %v466 = vor.u32 4788187, %v465
    %v467 = vand.u32 2147483647, %v466
    %v469 = vcvt.s32.f32 %v462
    %v470 = vmul.f32 %v469, %v467
    %v471 = vxor.u32 %v470, 2147483648
    %v472 = vsel %vm389, %v471, %v470
    %v473 = vsub.s32 4, %v449
    %v474 = vsel %vm389, %v473, %v449
    %v475 = vsel %vm388, %v282, %v472
    %v476 = vsel %vm388, 0, %v474
    %v477 = vcosq.f32.pop %v475
    %v478 = vsinq.f32.pop %v475
    %vm479 = vweird.f32 %v282
    %v480 = vand.u32 %v476, 3
    %vm481 = vcmp.lt.s32.totalorder %v480, 2
    %vm482 = vcmp.eq.s32.totalorder %v480, 0
    %v483 = vxor.u32 %v478, 2147483648
    %v484 = vsel %vm482, %v477, %v483
    %vm485 = vcmp.eq.s32.totalorder %v480, 2
    %v486 = vxor.u32 %v477, 2147483648
    %v487 = vsel %vm485, %v486, %v478
    %v488 = vsel %vm481, %v484, %v487
    %v489 = vsel %vm479, nan, %v488
    %vm490 = vcmp.gt.f32.partialorder %v281, 0.5
    %v491 = vsel %vm490, %v489, %v386
    %vm492 = vcmp.gt.f32.partialorder %v280, 0.5
    %v493 = vsel %vm492, %v278, %v491
    %vm494 = vcmask 843776
    %495 = vst.msk [vmem:[#allocation8] sm:$0x1] %vm494, %v493
    // Predicated region
    $region26: #{tpu_custom_call.1} parent=1 // pred_check
      _
    $region27: #{tpu_custom_call.1} parent=1 // pred_check_branch
      %497 = sbr.rel (0) target = $region29
    $region28: #{tpu_custom_call.1} parent=1 // pred_region
      %s499 = ssub.s32 16, 16
      %500 = vsyncadd [#allocation4], %s499
      %s502 = sshll.u32 [#allocation8], 4
      %s503 = int_to_ptr.vmem [resolvable:$true] %s502
      %505 = dma.vmem_to_hbm [thread:$0]  %s503, 16, %s3, [#allocation4]
    $region29: #{tpu_custom_call.1} parent=1 // pred_fallthru
      _
    // Predicated region
    $region30: #{tpu_custom_call.1} parent=1 // pred_check
      _
    $region31: #{tpu_custom_call.1} parent=1 // pred_check_branch
      %507 = sbr.rel (0) target = $region33
    $region32: #{tpu_custom_call.1} parent=1 // pred_region
      %508 = dma.done [#allocation4], 16
    $region33: #{tpu_custom_call.1} parent=1 // pred_fallthru
      _
    %509 = vsyncpa [#allocation3], 1
    %510 = vsyncpa [#allocation6], 1
    %511 = vsyncpa [#allocation4], 1

</llo_original>
